<compile_context>
chip_gen: v7x
topology: tpu7x:2x2x1
jax: 0.10.0
libtpu: 0.0.40
codegen_flags: <defaults>
</compile_context>

<pallas_src>
import functools

import jax
import jax.numpy as jnp
from jax.experimental import pallas as pl
from jax.experimental.pallas import tpu as pltpu

LN_EPS = 1e-5  # nn.LayerNorm default


def _token_learner_kernel(x_ref, w12g_ref, b12_ref, wft_ref, out_ref):
    # x_ref:   [C, Bt*HW]  lane-merged, channels on sublanes (un-normalized x)
    # w12g:    [NT, C]     fused attention weight: (w2 @ w1_dense) * gamma
    # b12:     [NT, 1]     fused attention bias:   (w2 @ w1_dense) @ beta
    # wft:     [C, C]      feature-conv weight, pre-transposed (wf_dense.T)
    # out_ref: [Bt, NT, C]
    bt = out_ref.shape[0]
    hw = x_ref.shape[1] // bt
    mxu_dt = w12g_ref.dtype                       # f32 or bf16 MXU operands

    x_raw = x_ref[...]                            # [C, Bt*HW] (input dtype)
    x = x_raw.astype(jnp.float32)

    # ---- LayerNorm over channels (sublane axis); per-column statistics ----
    mean = jnp.mean(x, axis=0, keepdims=True)                 # [1, Bt*HW]
    xc = x - mean
    var = jnp.mean(xc * xc, axis=0, keepdims=True)
    xhat = xc * jax.lax.rsqrt(var + LN_EPS)                   # [C, Bt*HW]
    # (gamma/beta are folded into w12g / b12 on the host.)

    # ---- attention logits: ONE fused matmul over all batch columns ----
    logits = jnp.dot(w12g_ref[...], xhat.astype(mxu_dt),
                     preferred_element_type=jnp.float32) + b12_ref[...]  # [NT, Bt*HW]

    x_mxu = x_raw if x_raw.dtype == mxu_dt else x_raw.astype(mxu_dt)
    wft = wft_ref[...]

    # Per-batch-element epilogue on static, 128-lane-aligned HW segments.
    # Per-iteration live state is tiny ([NT,HW] + [NT,C]) so a static unrolled
    # loop does not pressure the 64-vreg file even for larger batch_block.
    for bi in range(bt):
        seg = slice(bi * hw, (bi + 1) * hw)
        lseg = logits[:, seg]                                  # [NT, HW]

        # softmax over spatial positions (lane axis); normalization deferred
        m = jnp.max(lseg, axis=-1, keepdims=True)              # [NT, 1]
        e = jnp.exp(lseg - m)                                  # [NT, HW]
        denom = jnp.sum(e, axis=-1, keepdims=True)             # [NT, 1]

        # pooled_un[nt, c] = sum_hw e[nt, hw] * x[c, hw]
        # (If a materialized vxpose shows up in the lowered MLIR for this
        #  lane/lane contraction, transpose the smaller `e` operand instead.)
        pooled = jax.lax.dot_general(
            e.astype(mxu_dt), x_mxu[:, seg],
            dimension_numbers=(((1,), (1,)), ((), ())),
            preferred_element_type=jnp.float32)                # [NT, C]

        # feature conv AFTER pooling (algebraically identical, HW/NT x cheaper)
        out = jnp.dot(pooled.astype(mxu_dt), wft,
                      preferred_element_type=jnp.float32)      # [NT, C]
        out = out * pl.reciprocal(denom, approx=True)          # deferred norm
        out_ref[bi] = out.astype(out_ref.dtype)


def _grouped_to_dense(w, num_groups):
    """Grouped 1x1 conv weight [C_out, C_in/groups] -> dense block-diagonal
    [C_out, C_in] so that y^T = W_dense @ x^T matches F.conv2d(..., groups)."""
    c_out, _ = w.shape
    out_g = c_out // num_groups
    blocks = [w[g * out_g:(g + 1) * out_g] for g in range(num_groups)]
    return jax.scipy.linalg.block_diag(*blocks)


@functools.partial(jax.jit, static_argnames=("num_tokens", "num_groups",
                                             "batch_block", "compute_dtype"))
def token_learner_v11(x_nchw, params, *, num_tokens, num_groups,
                      batch_block=None, compute_dtype=jnp.float32):
    """x_nchw: [B, C, H, W] -> returns [B, num_tokens, C]."""
    b, c, h, w = x_nchw.shape
    hw = h * w
    if batch_block is None:
        batch_block = b                      # one fat grid step by default
    assert b % batch_block == 0, "pad the batch or pick a divisor of B"
    nsteps = b // batch_block

    # Lane-merged activations: [B,C,H,W] -> [C, B*HW].  Outer-dim transpose
    # only; the HW lanes stay contiguous, so this is a cheap HBM copy.
    x = jnp.transpose(x_nchw.reshape(b, c, hw), (1, 0, 2)).reshape(c, b * hw)
    x = x.astype(compute_dtype)              # bf16 here halves input DMA

    gamma = params["ln_gamma"].astype(jnp.float32)
    beta = params["ln_beta"].astype(jnp.float32)
    w1 = _grouped_to_dense(params["attn_conv1"].astype(jnp.float32), num_groups)  # [C, C]
    w2 = params["attn_conv2"].astype(jnp.float32)                                 # [NT, C]
    wf = _grouped_to_dense(params["feat_conv"].astype(jnp.float32), num_groups)   # [C, C]

    # Host-side algebraic fusion (exact: no nonlinearity between the convs):
    #   logits = w2 @ (w1 @ (xhat*gamma + beta)) = (w2@w1 * gamma) @ xhat + (w2@w1)@beta
    w12 = w2 @ w1                                            # [NT, C]
    w12g = (w12 * gamma[None, :]).astype(compute_dtype)      # [NT, C]
    bias12 = (w12 @ beta).reshape(num_tokens, 1)             # [NT, 1], stays f32
    # Feature conv reassociated to after pooling: out = (e @ x^T) @ wf^T.
    wft = wf.T.astype(compute_dtype)                         # [C, C]

    # VMEM budget (double-buffered tiles + weights), with headroom; keeps the
    # sizing honest on v7x's 64 MiB VMEM at production shapes.
    itemsize = jnp.dtype(compute_dtype).itemsize
    tile_bytes = (c * batch_block * hw * itemsize
                  + batch_block * num_tokens * c * x_nchw.dtype.itemsize
                  + (num_tokens * c + num_tokens + c * c) * itemsize)
    vmem_limit = int(min(max(8 * tile_bytes, 16 << 20), 96 << 20))

    const = lambda *shape: pl.BlockSpec(shape, lambda i: tuple(0 for _ in shape))

    out = pl.pallas_call(
        _token_learner_kernel,
        out_shape=jax.ShapeDtypeStruct((b, num_tokens, c), x_nchw.dtype),
        grid_spec=pltpu.PrefetchScalarGridSpec(
            num_scalar_prefetch=0,
            grid=(nsteps,),
            in_specs=[
                pl.BlockSpec((c, batch_block * hw), lambda i: (0, i)),
                const(num_tokens, c),   # w12g  (fused attention weight)
                const(num_tokens, 1),   # bias12
                const(c, c),            # wf^T
            ],
            out_specs=pl.BlockSpec((batch_block, num_tokens, c),
                                   lambda i: (i, 0, 0)),
        ),
        compiler_params=pltpu.CompilerParams(
            dimension_semantics=("parallel",),
            vmem_limit_bytes=vmem_limit),
    )(x, w12g, bias12, wft)
    return out


def _reference(x_nchw, params, num_tokens, num_groups):
    """Pure-JAX reference mirroring the PyTorch forward (unfused math)."""
    b, c, h, w = x_nchw.shape
    x = jnp.transpose(x_nchw, (0, 2, 3, 1)).reshape(b, h * w, c)
    mean = jnp.mean(x, axis=-1, keepdims=True)
    var = jnp.mean((x - mean) ** 2, axis=-1, keepdims=True)
    xn = (x - mean) / jnp.sqrt(var + LN_EPS)
    xn = xn * params["ln_gamma"] + params["ln_beta"]
    w1 = _grouped_to_dense(params["attn_conv1"], num_groups)
    w2 = params["attn_conv2"]
    wf = _grouped_to_dense(params["feat_conv"], num_groups)
    logits = xn @ w1.T @ w2.T                     # [B, HW, NT]
    sel = jnp.transpose(logits, (0, 2, 1))        # [B, NT, HW]
    sel = jax.nn.softmax(sel, axis=-1)
    feat = x @ wf.T                               # [B, HW, C]
    return jnp.einsum("bsi,bid->bsd", sel, feat)


if __name__ == "__main__":
    # Small deterministic config consistent with the module.
    B, C, H, W = 2, 32, 16, 16
    NUM_TOKENS = 8
    NUM_GROUPS = 2

    key = jax.random.PRNGKey(0)
    kx, k1, k2, k3, k4, k5 = jax.random.split(key, 6)

    x = jax.random.normal(kx, (B, C, H, W), dtype=jnp.float32)
    params = {
        "ln_gamma": 1.0 + 0.1 * jax.random.normal(k4, (C,), jnp.float32),
        "ln_beta": 0.1 * jax.random.normal(k5, (C,), jnp.float32),
        # conv weights [out, in/groups] (1x1 kernels squeezed)
        "attn_conv1": 0.1 * jax.random.normal(k1, (C, C // NUM_GROUPS), jnp.float32),
        "attn_conv2": 0.1 * jax.random.normal(k2, (NUM_TOKENS, C), jnp.float32),
        "feat_conv": 0.1 * jax.random.normal(k3, (C, C // NUM_GROUPS), jnp.float32),
    }

    ref = _reference(x, params, NUM_TOKENS, NUM_GROUPS)

    # f32 MXU operands: tight check against the unfused reference.
    out = token_learner_v11(x, params, num_tokens=NUM_TOKENS,
                            num_groups=NUM_GROUPS)
    out = jax.block_until_ready(out)
    assert out.shape == (B, NUM_TOKENS, C)
    assert jnp.allclose(out, ref, atol=1e-3, rtol=1e-3), (
        float(jnp.max(jnp.abs(out - ref))))

    # bf16 MXU operands (halved input DMA, single-pass MXU); looser tolerance
    # per the review's note on bf16 precision.
    out_bf16 = token_learner_v11(x, params, num_tokens=NUM_TOKENS,
                                 num_groups=NUM_GROUPS,
                                 compute_dtype=jnp.bfloat16)
    out_bf16 = jax.block_until_ready(out_bf16)
    assert jnp.allclose(out_bf16, ref, atol=2e-2, rtol=2e-2), (
        float(jnp.max(jnp.abs(out_bf16 - ref))))

    print("KERNEL_OK")
</pallas_src>

<mosaic_0001>
module attributes {stable_mosaic.version = 11 : i64} {
  func.func @_token_learner_kernel(%arg0: i32, %arg1: memref<32x512xf32, #tpu.memory_space<vmem>>, %arg2: memref<8x32xf32, #tpu.memory_space<vmem>>, %arg3: memref<8x1xf32, #tpu.memory_space<vmem>>, %arg4: memref<32x32xf32, #tpu.memory_space<vmem>>, %arg5: memref<2x8x32xf32, #tpu.memory_space<vmem>>) attributes {dimension_semantics = [#tpu.dimension_semantics<parallel>], iteration_bounds = array<i64: 1>, scalar_prefetch = 0 : i64, scratch_operands = 0 : i64, tpu.core_type = #tpu.core_type<tc>, window_params = [{transform_indices = @transform_0, window_bounds = array<i64: 32, 512>}, {pipeline_mode = #tpu.pipeline_mode<synchronous>, transform_indices = @transform_1, window_bounds = array<i64: 8, 32>}, {pipeline_mode = #tpu.pipeline_mode<synchronous>, transform_indices = @transform_2, window_bounds = array<i64: 8, 1>}, {pipeline_mode = #tpu.pipeline_mode<synchronous>, transform_indices = @transform_3, window_bounds = array<i64: 32, 32>}, {transform_indices = @transform_4, window_bounds = array<i64: 2, 8, 32>}]} {
    %c0 = arith.constant 0 : index
    %c0_0 = arith.constant 0 : index
    %0 = vector.load %arg1[%c0, %c0_0] : memref<32x512xf32, #tpu.memory_space<vmem>>, vector<32x512xf32>
    %cst = arith.constant dense<0.000000e+00> : vector<512xf32>
    %1 = vector.multi_reduction <add>, %0, %cst [0] : vector<32x512xf32> to vector<512xf32>
    %2 = vector.shape_cast %1 : vector<512xf32> to vector<1x512xf32>
    %cst_1 = arith.constant 3.200000e+01 : f32
    %3 = vector.broadcast %cst_1 : f32 to vector<1x512xf32>
    %4 = arith.divf %2, %3 : vector<1x512xf32>
    %5 = vector.broadcast %4 : vector<1x512xf32> to vector<32x512xf32>
    %6 = arith.subf %0, %5 : vector<32x512xf32>
    %7 = arith.mulf %6, %6 : vector<32x512xf32>
    %cst_2 = arith.constant dense<0.000000e+00> : vector<512xf32>
    %8 = vector.multi_reduction <add>, %7, %cst_2 [0] : vector<32x512xf32> to vector<512xf32>
    %9 = vector.shape_cast %8 : vector<512xf32> to vector<1x512xf32>
    %cst_3 = arith.constant 3.200000e+01 : f32
    %10 = vector.broadcast %cst_3 : f32 to vector<1x512xf32>
    %11 = arith.divf %9, %10 : vector<1x512xf32>
    %cst_4 = arith.constant 9.99999974E-6 : f32
    %12 = vector.broadcast %cst_4 : f32 to vector<1x512xf32>
    %13 = arith.addf %11, %12 : vector<1x512xf32>
    %14 = math.rsqrt %13 : vector<1x512xf32>
    %15 = vector.broadcast %14 : vector<1x512xf32> to vector<32x512xf32>
    %16 = arith.mulf %6, %15 : vector<32x512xf32>
    %c0_5 = arith.constant 0 : index
    %c0_6 = arith.constant 0 : index
    %17 = vector.load %arg2[%c0_5, %c0_6] : memref<8x32xf32, #tpu.memory_space<vmem>>, vector<8x32xf32>
    %cst_7 = arith.constant dense<0.000000e+00> : vector<8x512xf32>
    %18 = tpu.matmul %17, %16, %cst_7 {dimension_numbers = #tpu.dot_dimension_numbers<[1], [0], [0], [1], [0, 0, 1, 1], [], []>} : vector<8x32xf32>, vector<32x512xf32>, vector<8x512xf32> -> vector<8x512xf32>
    %c0_8 = arith.constant 0 : index
    %c0_9 = arith.constant 0 : index
    %19 = vector.load %arg3[%c0_8, %c0_9] : memref<8x1xf32, #tpu.memory_space<vmem>>, vector<8x1xf32>
    %20 = vector.broadcast %19 : vector<8x1xf32> to vector<8x512xf32>
    %21 = arith.addf %18, %20 : vector<8x512xf32>
    %c0_10 = arith.constant 0 : index
    %c0_11 = arith.constant 0 : index
    %22 = vector.load %arg4[%c0_10, %c0_11] : memref<32x32xf32, #tpu.memory_space<vmem>>, vector<32x32xf32>
    %23 = vector.extract_strided_slice %21 {offsets = [0, 0], sizes = [8, 256], strides = [1, 1]} : vector<8x512xf32> to vector<8x256xf32>
    %cst_12 = arith.constant dense<0xFF800000> : vector<8xf32>
    %24 = vector.multi_reduction <maximumf>, %23, %cst_12 [1] : vector<8x256xf32> to vector<8xf32>
    %25 = vector.shape_cast %24 : vector<8xf32> to vector<8x1xf32>
    %26 = vector.broadcast %25 : vector<8x1xf32> to vector<8x256xf32>
    %27 = arith.subf %23, %26 : vector<8x256xf32>
    %28 = math.exp %27 : vector<8x256xf32>
    %cst_13 = arith.constant dense<0.000000e+00> : vector<8xf32>
    %29 = vector.multi_reduction <add>, %28, %cst_13 [1] : vector<8x256xf32> to vector<8xf32>
    %30 = vector.shape_cast %29 : vector<8xf32> to vector<8x1xf32>
    %31 = vector.extract_strided_slice %0 {offsets = [0, 0], sizes = [32, 256], strides = [1, 1]} : vector<32x512xf32> to vector<32x256xf32>
    %cst_14 = arith.constant dense<0.000000e+00> : vector<8x32xf32>
    %32 = tpu.matmul %28, %31, %cst_14 {dimension_numbers = #tpu.dot_dimension_numbers<[1], [1], [0], [0], [0, 0, 1, 0], [], []>} : vector<8x256xf32>, vector<32x256xf32>, vector<8x32xf32> -> vector<8x32xf32>
    %cst_15 = arith.constant dense<0.000000e+00> : vector<8x32xf32>
    %33 = tpu.matmul %32, %22, %cst_15 {dimension_numbers = #tpu.dot_dimension_numbers<[1], [0], [0], [1], [0, 0, 1, 1], [], []>} : vector<8x32xf32>, vector<32x32xf32>, vector<8x32xf32> -> vector<8x32xf32>
    %34 = tpu.reciprocal %30 {approx = true} : vector<8x1xf32> -> vector<8x1xf32>
    %35 = vector.broadcast %34 : vector<8x1xf32> to vector<8x32xf32>
    %36 = arith.mulf %33, %35 : vector<8x32xf32>
    %c0_16 = arith.constant 0 : index
    %c0_17 = arith.constant 0 : index
    %c0_18 = arith.constant 0 : index
    %37 = vector.load %arg5[%c0_16, %c0_17, %c0_18] : memref<2x8x32xf32, #tpu.memory_space<vmem>>, vector<1x8x32xf32>
    %38 = vector.shape_cast %37 : vector<1x8x32xf32> to vector<8x32xf32>
    %39 = vector.shape_cast %36 : vector<8x32xf32> to vector<1x8x32xf32>
    tpu.vector_store %arg5[%c0_16, %c0_17, %c0_18], %39 {strides = array<i32>} : memref<2x8x32xf32, #tpu.memory_space<vmem>>, vector<1x8x32xf32>,
    %40 = vector.extract_strided_slice %21 {offsets = [0, 256], sizes = [8, 256], strides = [1, 1]} : vector<8x512xf32> to vector<8x256xf32>
    %cst_19 = arith.constant dense<0xFF800000> : vector<8xf32>
    %41 = vector.multi_reduction <maximumf>, %40, %cst_19 [1] : vector<8x256xf32> to vector<8xf32>
    %42 = vector.shape_cast %41 : vector<8xf32> to vector<8x1xf32>
    %43 = vector.broadcast %42 : vector<8x1xf32> to vector<8x256xf32>
    %44 = arith.subf %40, %43 : vector<8x256xf32>
    %45 = math.exp %44 : vector<8x256xf32>
    %cst_20 = arith.constant dense<0.000000e+00> : vector<8xf32>
    %46 = vector.multi_reduction <add>, %45, %cst_20 [1] : vector<8x256xf32> to vector<8xf32>
    %47 = vector.shape_cast %46 : vector<8xf32> to vector<8x1xf32>
    %48 = vector.extract_strided_slice %0 {offsets = [0, 256], sizes = [32, 256], strides = [1, 1]} : vector<32x512xf32> to vector<32x256xf32>
    %cst_21 = arith.constant dense<0.000000e+00> : vector<8x32xf32>
    %49 = tpu.matmul %45, %48, %cst_21 {dimension_numbers = #tpu.dot_dimension_numbers<[1], [1], [0], [0], [0, 0, 1, 0], [], []>} : vector<8x256xf32>, vector<32x256xf32>, vector<8x32xf32> -> vector<8x32xf32>
    %cst_22 = arith.constant dense<0.000000e+00> : vector<8x32xf32>
    %50 = tpu.matmul %49, %22, %cst_22 {dimension_numbers = #tpu.dot_dimension_numbers<[1], [0], [0], [1], [0, 0, 1, 1], [], []>} : vector<8x32xf32>, vector<32x32xf32>, vector<8x32xf32> -> vector<8x32xf32>
    %51 = tpu.reciprocal %47 {approx = true} : vector<8x1xf32> -> vector<8x1xf32>
    %52 = vector.broadcast %51 : vector<8x1xf32> to vector<8x32xf32>
    %53 = arith.mulf %50, %52 : vector<8x32xf32>
    %c1 = arith.constant 1 : index
    %c0_23 = arith.constant 0 : index
    %c0_24 = arith.constant 0 : index
    %54 = vector.load %arg5[%c1, %c0_23, %c0_24] : memref<2x8x32xf32, #tpu.memory_space<vmem>>, vector<1x8x32xf32>
    %55 = vector.shape_cast %54 : vector<1x8x32xf32> to vector<8x32xf32>
    %56 = vector.shape_cast %53 : vector<8x32xf32> to vector<1x8x32xf32>
    tpu.vector_store %arg5[%c1, %c0_23, %c0_24], %56 {strides = array<i32>} : memref<2x8x32xf32, #tpu.memory_space<vmem>>, vector<1x8x32xf32>,
    return
  }
  func.func @transform_0(%arg0: i32) -> (i32, i32) {
    %c0_i32 = arith.constant 0 : i32
    %c0_i32_0 = arith.constant 0 : i32
    return %c0_i32, %arg0 : i32, i32
  }
  func.func @transform_1(%arg0: i32) -> (i32, i32) {
    %c0_i32 = arith.constant 0 : i32
    %c0_i32_0 = arith.constant 0 : i32
    %c0_i32_1 = arith.constant 0 : i32
    return %c0_i32, %c0_i32_0 : i32, i32
  }
  func.func @transform_2(%arg0: i32) -> (i32, i32) {
    %c0_i32 = arith.constant 0 : i32
    %c0_i32_0 = arith.constant 0 : i32
    %c0_i32_1 = arith.constant 0 : i32
    return %c0_i32, %c0_i32_0 : i32, i32
  }
  func.func @transform_3(%arg0: i32) -> (i32, i32) {
    %c0_i32 = arith.constant 0 : i32
    %c0_i32_0 = arith.constant 0 : i32
    %c0_i32_1 = arith.constant 0 : i32
    return %c0_i32, %c0_i32_0 : i32, i32
  }
  func.func @transform_4(%arg0: i32) -> (i32, i32, i32) {
    %c0_i32 = arith.constant 0 : i32
    %c0_i32_0 = arith.constant 0 : i32
    %c0_i32_1 = arith.constant 0 : i32
    return %arg0, %c0_i32, %c0_i32_0 : i32, i32, i32
  }
}

</mosaic_0001>

<llo_original>
// kernel: token_learner_v11.1
$region0: #{token_learner_v11.1}
  #allocation0 [shape = 'u32[]', space=smem, size = 0x4, offset = 0x4, fixed_abs, tag = 'smem constant byte address 0x4 - core index']
  #allocation1 [shape = 'u32[144,128]{1,0:T(1,128)}', space=vmem, size = 0x12000, scoped, tag = 'internal scratch']
  %s0 = inlined_call_operand.vmem [shape: f32[32,512], index: 0, kind: input, shape index: {}]
  %s1 = inlined_call_operand.vmem [shape: f32[8,32], index: 1, kind: input, shape index: {}]
  %s2 = inlined_call_operand.vmem [shape: f32[8,1], index: 2, kind: input, shape index: {}]
  %s3 = inlined_call_operand.vmem [shape: f32[32,32], index: 3, kind: input, shape index: {}]
  %s4 = inlined_call_operand.hbm [shape: f32[2,8,32], index: 4, kind: output, shape index: {}]
  %s5 = sld [smem:[#allocation0]]
  $region26: #{token_learner_v11.1} parent=0
    _
  %s7 = ssub.s32 1, %s5
  %s8 = scalar_select 0, %s7, %s5
  $region1: #{token_learner_v11.1} parent=0
    #allocation2 [shape = 'u8[8192]{0}', space=vmem, size = 0x2000, scoped, tag = 'output window, operand 0, single buffered']
    #allocation3 [shape = 's32[1]{0}', space=sflag, size = 0x4, scoped, tag = 'scoped memory for token_learner_v11.1']
    %9 = vsyncpa [#allocation3], 0
    // Predicated region
    $region2: #{token_learner_v11.1} parent=1 // pred_check
      _
    $region3: #{token_learner_v11.1} parent=1 // pred_check_branch
      %11 = sbr.rel (0) target = $region5
    $region4: #{token_learner_v11.1} parent=1 // pred_region
      _
    $region5: #{token_learner_v11.1} parent=1 // pred_fallthru
      _
    // Predicated region
    $region6: #{token_learner_v11.1} parent=1 // pred_check
      _
    $region7: #{token_learner_v11.1} parent=1 // pred_check_branch
      %13 = sbr.rel (0) target = $region9
    $region8: #{token_learner_v11.1} parent=1 // pred_region
      _
    $region9: #{token_learner_v11.1} parent=1 // pred_fallthru
      _
    // Predicated region
    $region10: #{token_learner_v11.1} parent=1 // pred_check
      _
    $region11: #{token_learner_v11.1} parent=1 // pred_check_branch
      %15 = sbr.rel (0) target = $region13
    $region12: #{token_learner_v11.1} parent=1 // pred_region
      _
    $region13: #{token_learner_v11.1} parent=1 // pred_fallthru
      _
    // Predicated region
    $region14: #{token_learner_v11.1} parent=1 // pred_check
      _
    $region15: #{token_learner_v11.1} parent=1 // pred_check_branch
      %17 = sbr.rel (0) target = $region17
    $region16: #{token_learner_v11.1} parent=1 // pred_region
      _
    $region17: #{token_learner_v11.1} parent=1 // pred_fallthru
      _
    %v18 = vld [vmem:[%s0] sm:$0xff]
    %v19 = vld [vmem:[%s0 + $0x8] sm:$0xff]
    %v20 = vld [vmem:[%s0 + $0x10] sm:$0xff]
    %v21 = vld [vmem:[%s0 + $0x18] sm:$0xff]
    %v22 = vld [vmem:[%s0 + $0x20] sm:$0xff]
    %v23 = vld [vmem:[%s0 + $0x28] sm:$0xff]
    %v24 = vld [vmem:[%s0 + $0x30] sm:$0xff]
    %v25 = vld [vmem:[%s0 + $0x38] sm:$0xff]
    %v26 = vld [vmem:[%s0 + $0x40] sm:$0xff]
    %v27 = vld [vmem:[%s0 + $0x48] sm:$0xff]
    %v28 = vld [vmem:[%s0 + $0x50] sm:$0xff]
    %v29 = vld [vmem:[%s0 + $0x58] sm:$0xff]
    %v30 = vld [vmem:[%s0 + $0x60] sm:$0xff]
    %v31 = vld [vmem:[%s0 + $0x68] sm:$0xff]
    %v32 = vld [vmem:[%s0 + $0x70] sm:$0xff]
    %v33 = vld [vmem:[%s0 + $0x78] sm:$0xff]
    %v34 = vadd.f32 %v18, %v22
    %v35 = vadd.f32 %v34, %v26
    %v36 = vadd.f32 %v35, %v30
    %v37 = vrot.slane %v36, 4
    %v38 = vadd.f32 %v36, %v37
    %v39 = vrot.slane %v38, 2
    %v40 = vadd.f32 %v38, %v39
    %v41 = vrot.slane %v40, 1
    %v42 = vadd.f32 %v40, %v41
    %v43 = vadd.f32 %v19, %v23
    %v44 = vadd.f32 %v43, %v27
    %v45 = vadd.f32 %v44, %v31
    %v46 = vrot.slane %v45, 4
    %v47 = vadd.f32 %v45, %v46
    %v48 = vrot.slane %v47, 2
    %v49 = vadd.f32 %v47, %v48
    %v50 = vrot.slane %v49, 1
    %v51 = vadd.f32 %v49, %v50
    %v52 = vadd.f32 %v20, %v24
    %v53 = vadd.f32 %v52, %v28
    %v54 = vadd.f32 %v53, %v32
    %v55 = vrot.slane %v54, 4
    %v56 = vadd.f32 %v54, %v55
    %v57 = vrot.slane %v56, 2
    %v58 = vadd.f32 %v56, %v57
    %v59 = vrot.slane %v58, 1
    %v60 = vadd.f32 %v58, %v59
    %v61 = vadd.f32 %v21, %v25
    %v62 = vadd.f32 %v61, %v29
    %v63 = vadd.f32 %v62, %v33
    %v64 = vrot.slane %v63, 4
    %v65 = vadd.f32 %v63, %v64
    %v66 = vrot.slane %v65, 2
    %v67 = vadd.f32 %v65, %v66
    %v68 = vrot.slane %v67, 1
    %v69 = vadd.f32 %v67, %v68
    %v70 = vrcp.pop 32.0
    %v71 = vmul.f32 %v42, %v70
    %v72 = vmul.f32 %v51, %v70
    %v73 = vmul.f32 %v60, %v70
    %v74 = vmul.f32 %v69, %v70
    %v75 = vsub.f32 %v18, %v71
    %v76 = vsub.f32 %v19, %v72
    %v77 = vsub.f32 %v20, %v73
    %v78 = vsub.f32 %v21, %v74
    %v79 = vsub.f32 %v22, %v71
    %v80 = vsub.f32 %v23, %v72
    %v81 = vsub.f32 %v24, %v73
    %v82 = vsub.f32 %v25, %v74
    %v83 = vsub.f32 %v26, %v71
    %v84 = vsub.f32 %v27, %v72
    %v85 = vsub.f32 %v28, %v73
    %v86 = vsub.f32 %v29, %v74
    %v87 = vsub.f32 %v30, %v71
    %v88 = vsub.f32 %v31, %v72
    %v89 = vsub.f32 %v32, %v73
    %v90 = vsub.f32 %v33, %v74
    %v91 = vmul.f32 %v75, %v75
    %v92 = vmul.f32 %v76, %v76
    %v93 = vmul.f32 %v77, %v77
    %v94 = vmul.f32 %v78, %v78
    %v95 = vmul.f32 %v79, %v79
    %v96 = vmul.f32 %v80, %v80
    %v97 = vmul.f32 %v81, %v81
    %v98 = vmul.f32 %v82, %v82
    %v99 = vmul.f32 %v83, %v83
    %v100 = vmul.f32 %v84, %v84
    %v101 = vmul.f32 %v85, %v85
    %v102 = vmul.f32 %v86, %v86
    %v103 = vmul.f32 %v87, %v87
    %v104 = vmul.f32 %v88, %v88
    %v105 = vmul.f32 %v89, %v89
    %v106 = vmul.f32 %v90, %v90
    %v107 = vadd.f32 %v91, %v95
    %v108 = vadd.f32 %v107, %v99
    %v109 = vadd.f32 %v108, %v103
    %v110 = vrot.slane %v109, 4
    %v111 = vadd.f32 %v109, %v110
    %v112 = vrot.slane %v111, 2
    %v113 = vadd.f32 %v111, %v112
    %v114 = vrot.slane %v113, 1
    %v115 = vadd.f32 %v113, %v114
    %v116 = vadd.f32 %v92, %v96
    %v117 = vadd.f32 %v116, %v100
    %v118 = vadd.f32 %v117, %v104
    %v119 = vrot.slane %v118, 4
    %v120 = vadd.f32 %v118, %v119
    %v121 = vrot.slane %v120, 2
    %v122 = vadd.f32 %v120, %v121
    %v123 = vrot.slane %v122, 1
    %v124 = vadd.f32 %v122, %v123
    %v125 = vadd.f32 %v93, %v97
    %v126 = vadd.f32 %v125, %v101
    %v127 = vadd.f32 %v126, %v105
    %v128 = vrot.slane %v127, 4
    %v129 = vadd.f32 %v127, %v128
    %v130 = vrot.slane %v129, 2
    %v131 = vadd.f32 %v129, %v130
    %v132 = vrot.slane %v131, 1
    %v133 = vadd.f32 %v131, %v132
    %v134 = vadd.f32 %v94, %v98
    %v135 = vadd.f32 %v134, %v102
    %v136 = vadd.f32 %v135, %v106
    %v137 = vrot.slane %v136, 4
    %v138 = vadd.f32 %v136, %v137
    %v139 = vrot.slane %v138, 2
    %v140 = vadd.f32 %v138, %v139
    %v141 = vrot.slane %v140, 1
    %v142 = vadd.f32 %v140, %v141
    %v143 = vmul.f32 %v115, %v70
    %v144 = vmul.f32 %v124, %v70
    %v145 = vmul.f32 %v133, %v70
    %v146 = vmul.f32 %v142, %v70
    %v147 = vadd.f32 %v143, 1e-05
    %v148 = vadd.f32 %v144, 1e-05
    %v149 = vadd.f32 %v145, 1e-05
    %v150 = vadd.f32 %v146, 1e-05
    %v151 = vrsqrt.pop %v147
    %v152 = vrsqrt.pop %v148
    %v153 = vrsqrt.pop %v149
    %v154 = vrsqrt.pop %v150
    %v155 = vmul.f32 %v75, %v151
    %v156 = vmul.f32 %v76, %v152
    %v157 = vmul.f32 %v77, %v153
    %v158 = vmul.f32 %v78, %v154
    %v159 = vmul.f32 %v79, %v151
    %v160 = vmul.f32 %v80, %v152
    %v161 = vmul.f32 %v81, %v153
    %v162 = vmul.f32 %v82, %v154
    %v163 = vmul.f32 %v83, %v151
    %v164 = vmul.f32 %v84, %v152
    %v165 = vmul.f32 %v85, %v153
    %v166 = vmul.f32 %v86, %v154
    %v167 = vmul.f32 %v87, %v151
    %v168 = vmul.f32 %v88, %v152
    %v169 = vmul.f32 %v89, %v153
    %v170 = vmul.f32 %v90, %v154
    %v171 = vld [vmem:[%s1] sm:$0xff]
    %v172 = vld [vmem:[%s2] sm:$0xff]
    %174 = vset.pattern.permute.xlu0 0
    %175 = vperm.xlu0 %174, %v172
    %v176 = vpop.permute.xlu0 %175
    %vm178 = vcmask 261120
    %v180 = vsel %vm178, %v171, 0
    %182 = vmatprep.subr.mxu0 %v156
    %183 = vmatpush1.msra.mxu0 %v155
    %184 = vmatprep.subr.mxu0 %v160
    %185 = vmatpush1.msra.mxu0 %v159
    %186 = vmatprep.subr.mxu0 %v164
    %187 = vmatpush1.msra.mxu0 %v163
    %188 = vmatprep.subr.mxu0 %v168
    %189 = vmatpush1.msra.mxu0 %v167
    %190 = vmatprep.subr.mxu0 0.0
    %191 = vmatpush1.msra.mxu0 0.0
    %192 = vmatprep.subr.mxu0 0.0
    %193 = vmatpush1.msra.mxu0 0.0
    %194 = vmatprep.subr.mxu0 0.0
    %195 = vmatpush1.msra.mxu0 0.0
    %196 = vmatprep.subr.mxu0 0.0
    %197 = vmatpush1.msra.mxu0 0.0
    %198 = vmatprep.subr.mxu0 0.0
    %199 = vmatpush1.msra.mxu0 0.0
    %200 = vmatprep.subr.mxu0 0.0
    %201 = vmatpush1.msra.mxu0 0.0
    %202 = vmatprep.subr.mxu0 0.0
    %203 = vmatpush1.msra.mxu0 0.0
    %204 = vmatprep.subr.mxu0 0.0
    %205 = vmatpush1.msra.mxu0 0.0
    %206 = vmatprep.subr.mxu0 0.0
    %207 = vmatpush1.msra.mxu0 0.0
    %208 = vmatprep.subr.mxu0 0.0
    %209 = vmatpush1.msra.mxu0 0.0
    %210 = vmatprep.subr.mxu0 0.0
    %211 = vmatpush1.msra.mxu0 0.0
    %212 = vmatprep.subr.mxu0 0.0
    %213 = vmatpush1.msra.mxu0 0.0
    %214 = vmatprep.subr.mxu0 0.0
    %215 = vmatpush1.msra.mxu0 0.0
    %216 = vmatprep.subr.mxu0 0.0
    %217 = vmatpush1.msra.mxu0 0.0
    %218 = vmatprep.subr.mxu0 0.0
    %219 = vmatpush1.msra.mxu0 0.0
    %220 = vmatprep.subr.mxu0 0.0
    %221 = vmatpush1.msra.mxu0 0.0
    %222 = vmatprep.subr.mxu0 0.0
    %223 = vmatpush1.msra.mxu0 0.0
    %224 = vmatprep.subr.mxu0 0.0
    %225 = vmatpush1.msra.mxu0 0.0
    %226 = vmatprep.subr.mxu0 0.0
    %227 = vmatpush1.msra.mxu0 0.0
    %228 = vmatprep.subr.mxu0 0.0
    %229 = vmatpush1.msra.mxu0 0.0
    %230 = vmatprep.subr.mxu0 0.0
    %231 = vmatpush1.msra.mxu0 0.0
    %232 = vmatprep.subr.mxu0 0.0
    %233 = vmatpush1.msra.mxu0 0.0
    %234 = vmatprep.subr.mxu0 0.0
    %235 = vmatpush1.msra.mxu0 0.0
    %236 = vmatprep.subr.mxu0 0.0
    %237 = vmatpush1.msra.mxu0 0.0
    %238 = vmatprep.subr.mxu0 0.0
    %239 = vmatpush1.msra.mxu0 0.0
    %240 = vmatprep.subr.mxu0 0.0
    %241 = vmatpush1.msra.mxu0 0.0
    %242 = vmatprep.subr.mxu0 0.0
    %243 = vmatpush1.msra.mxu0 0.0
    %244 = vmatprep.subr.mxu0 0.0
    %245 = vmatpush1.msra.mxu0 0.0
    %246 = vmatprep.mubr.f32.mxu0 0.0
    %247 = vmatmul.mubr.f32.gmra.mrb[0].mxu0 %v180
    %v248 = vpop.f32.mrb[0].mxu0
    %v249 = vadd.f32 %v176, %v248
    %v250 = vpop.f32.mrb[0].mxu0
    %v251 = vadd.f32 %v176, %v250
    %252 = vdwg.mxu0
    %253 = vmatprep.subr.mxu0 %v158
    %254 = vmatpush1.msra.mxu0 %v157
    %255 = vmatprep.subr.mxu0 %v162
    %256 = vmatpush1.msra.mxu0 %v161
    %257 = vmatprep.subr.mxu0 %v166
    %258 = vmatpush1.msra.mxu0 %v165
    %259 = vmatprep.subr.mxu0 %v170
    %260 = vmatpush1.msra.mxu0 %v169
    %261 = vmatprep.subr.mxu0 0.0
    %262 = vmatpush1.msra.mxu0 0.0
    %263 = vmatprep.subr.mxu0 0.0
    %264 = vmatpush1.msra.mxu0 0.0
    %265 = vmatprep.subr.mxu0 0.0
    %266 = vmatpush1.msra.mxu0 0.0
    %267 = vmatprep.subr.mxu0 0.0
    %268 = vmatpush1.msra.mxu0 0.0
    %269 = vmatprep.subr.mxu0 0.0
    %270 = vmatpush1.msra.mxu0 0.0
    %271 = vmatprep.subr.mxu0 0.0
    %272 = vmatpush1.msra.mxu0 0.0
    %273 = vmatprep.subr.mxu0 0.0
    %274 = vmatpush1.msra.mxu0 0.0
    %275 = vmatprep.subr.mxu0 0.0
    %276 = vmatpush1.msra.mxu0 0.0
    %277 = vmatprep.subr.mxu0 0.0
    %278 = vmatpush1.msra.mxu0 0.0
    %279 = vmatprep.subr.mxu0 0.0
    %280 = vmatpush1.msra.mxu0 0.0
    %281 = vmatprep.subr.mxu0 0.0
    %282 = vmatpush1.msra.mxu0 0.0
    %283 = vmatprep.subr.mxu0 0.0
    %284 = vmatpush1.msra.mxu0 0.0
    %285 = vmatprep.subr.mxu0 0.0
    %286 = vmatpush1.msra.mxu0 0.0
    %287 = vmatprep.subr.mxu0 0.0
    %288 = vmatpush1.msra.mxu0 0.0
    %289 = vmatprep.subr.mxu0 0.0
    %290 = vmatpush1.msra.mxu0 0.0
    %291 = vmatprep.subr.mxu0 0.0
    %292 = vmatpush1.msra.mxu0 0.0
    %293 = vmatprep.subr.mxu0 0.0
    %294 = vmatpush1.msra.mxu0 0.0
    %295 = vmatprep.subr.mxu0 0.0
    %296 = vmatpush1.msra.mxu0 0.0
    %297 = vmatprep.subr.mxu0 0.0
    %298 = vmatpush1.msra.mxu0 0.0
    %299 = vmatprep.subr.mxu0 0.0
    %300 = vmatpush1.msra.mxu0 0.0
    %301 = vmatprep.subr.mxu0 0.0
    %302 = vmatpush1.msra.mxu0 0.0
    %303 = vmatprep.subr.mxu0 0.0
    %304 = vmatpush1.msra.mxu0 0.0
    %305 = vmatprep.subr.mxu0 0.0
    %306 = vmatpush1.msra.mxu0 0.0
    %307 = vmatprep.subr.mxu0 0.0
    %308 = vmatpush1.msra.mxu0 0.0
    %309 = vmatprep.subr.mxu0 0.0
    %310 = vmatpush1.msra.mxu0 0.0
    %311 = vmatprep.subr.mxu0 0.0
    %312 = vmatpush1.msra.mxu0 0.0
    %313 = vmatprep.subr.mxu0 0.0
    %314 = vmatpush1.msra.mxu0 0.0
    %315 = vmatprep.subr.mxu0 0.0
    %316 = vmatpush1.msra.mxu0 0.0
    %317 = vmatprep.mubr.f32.mxu0 0.0
    %318 = vmatmul.mubr.f32.gmra.mrb[0].mxu0 %v180
    %v319 = vpop.f32.mrb[0].mxu0
    %v320 = vadd.f32 %v176, %v319
    %v321 = vpop.f32.mrb[0].mxu0
    %v322 = vadd.f32 %v176, %v321
    %323 = vdwg.mxu0
    %v324 = vld [vmem:[%s3] sm:$0xff]
    %v325 = vld [vmem:[%s3 + $0x8] sm:$0xff]
    %v326 = vld [vmem:[%s3 + $0x10] sm:$0xff]
    %v327 = vld [vmem:[%s3 + $0x18] sm:$0xff]
    %v328 = vmax.f32 %v249, %v251
    %329 = vmax.xlane.f32.xlu0 %v328
    %v330 = vpop.xlane.xlu0 %329
    %v331 = vsub.f32 %v249, %v330
    %v332 = vsub.f32 %v251, %v330
    %v333 = vmul.f32 %v331, 1.442695
    %v334 = vpow.pop %v333
    %v335 = vmul.f32 %v332, 1.442695
    %v336 = vpow.pop %v335
    %v337 = vadd.f32 %v334, %v336
    %338 = vadd.xlane.f32.xlu0 %v337
    %v339 = vpop.xlane.xlu0 %338
    %340 = vmatprep.subr.mxu0 %v19
    %341 = vmatpush1.xpose.msra.mxu0 %v18
    %342 = vmatprep.subr.mxu0 %v23
    %343 = vmatpush1.xpose.msra.mxu0 %v22
    %344 = vmatprep.subr.mxu0 %v27
    %345 = vmatpush1.xpose.msra.mxu0 %v26
    %346 = vmatprep.subr.mxu0 %v31
    %347 = vmatpush1.xpose.msra.mxu0 %v30
    %348 = vmatprep.subr.mxu0 0.0
    %349 = vmatpush1.xpose.msra.mxu0 0.0
    %350 = vmatprep.subr.mxu0 0.0
    %351 = vmatpush1.xpose.msra.mxu0 0.0
    %352 = vmatprep.subr.mxu0 0.0
    %353 = vmatpush1.xpose.msra.mxu0 0.0
    %354 = vmatprep.subr.mxu0 0.0
    %355 = vmatpush1.xpose.msra.mxu0 0.0
    %356 = vmatprep.subr.mxu0 0.0
    %357 = vmatpush1.xpose.msra.mxu0 0.0
    %358 = vmatprep.subr.mxu0 0.0
    %359 = vmatpush1.xpose.msra.mxu0 0.0
    %360 = vmatprep.subr.mxu0 0.0
    %361 = vmatpush1.xpose.msra.mxu0 0.0
    %362 = vmatprep.subr.mxu0 0.0
    %363 = vmatpush1.xpose.msra.mxu0 0.0
    %364 = vmatprep.subr.mxu0 0.0
    %365 = vmatpush1.xpose.msra.mxu0 0.0
    %366 = vmatprep.subr.mxu0 0.0
    %367 = vmatpush1.xpose.msra.mxu0 0.0
    %368 = vmatprep.subr.mxu0 0.0
    %369 = vmatpush1.xpose.msra.mxu0 0.0
    %370 = vmatprep.subr.mxu0 0.0
    %371 = vmatpush1.xpose.msra.mxu0 0.0
    %372 = vmatprep.subr.mxu0 0.0
    %373 = vmatpush1.xpose.msra.mxu0 0.0
    %374 = vmatprep.subr.mxu0 0.0
    %375 = vmatpush1.xpose.msra.mxu0 0.0
    %376 = vmatprep.subr.mxu0 0.0
    %377 = vmatpush1.xpose.msra.mxu0 0.0
    %378 = vmatprep.subr.mxu0 0.0
    %379 = vmatpush1.xpose.msra.mxu0 0.0
    %380 = vmatprep.subr.mxu0 0.0
    %381 = vmatpush1.xpose.msra.mxu0 0.0
    %382 = vmatprep.subr.mxu0 0.0
    %383 = vmatpush1.xpose.msra.mxu0 0.0
    %384 = vmatprep.subr.mxu0 0.0
    %385 = vmatpush1.xpose.msra.mxu0 0.0
    %386 = vmatprep.subr.mxu0 0.0
    %387 = vmatpush1.xpose.msra.mxu0 0.0
    %388 = vmatprep.subr.mxu0 0.0
    %389 = vmatpush1.xpose.msra.mxu0 0.0
    %390 = vmatprep.subr.mxu0 0.0
    %391 = vmatpush1.xpose.msra.mxu0 0.0
    %392 = vmatprep.subr.mxu0 0.0
    %393 = vmatpush1.xpose.msra.mxu0 0.0
    %394 = vmatprep.subr.mxu0 0.0
    %395 = vmatpush1.xpose.msra.mxu0 0.0
    %396 = vmatprep.subr.mxu0 0.0
    %397 = vmatpush1.xpose.msra.mxu0 0.0
    %398 = vmatprep.subr.mxu0 0.0
    %399 = vmatpush1.xpose.msra.mxu0 0.0
    %400 = vmatprep.subr.mxu0 0.0
    %401 = vmatpush1.xpose.msra.mxu0 0.0
    %402 = vmatprep.subr.mxu0 0.0
    %403 = vmatpush1.xpose.msra.mxu0 0.0
    %404 = vmatprep.mubr.f32.mxu0 %v336
    %405 = vmatmul.mubr.f32.gmra.mrb[0].mxu0 %v334
    %v406 = vpop.f32.mrb[0].mxu0
    %v407 = vadd.f32 0.0, %v406
    %v408 = vpop.f32.mrb[0].mxu0
    %409 = vdwg.mxu0
    %v411 = vsel %vm178, %v407, 0
    %413 = vmatprep.subr.mxu0 0.0
    %414 = vmatpush1.msra.mxu0 %v324
    %415 = vmatprep.subr.mxu0 0.0
    %416 = vmatpush1.msra.mxu0 %v325
    %417 = vmatprep.subr.mxu0 0.0
    %418 = vmatpush1.msra.mxu0 %v326
    %419 = vmatprep.subr.mxu0 0.0
    %420 = vmatpush1.msra.mxu0 %v327
    %421 = vmatprep.subr.mxu0 0.0
    %422 = vmatpush1.msra.mxu0 0.0
    %423 = vmatprep.subr.mxu0 0.0
    %424 = vmatpush1.msra.mxu0 0.0
    %425 = vmatprep.subr.mxu0 0.0
    %426 = vmatpush1.msra.mxu0 0.0
    %427 = vmatprep.subr.mxu0 0.0
    %428 = vmatpush1.msra.mxu0 0.0
    %429 = vmatprep.subr.mxu0 0.0
    %430 = vmatpush1.msra.mxu0 0.0
    %431 = vmatprep.subr.mxu0 0.0
    %432 = vmatpush1.msra.mxu0 0.0
    %433 = vmatprep.subr.mxu0 0.0
    %434 = vmatpush1.msra.mxu0 0.0
    %435 = vmatprep.subr.mxu0 0.0
    %436 = vmatpush1.msra.mxu0 0.0
    %437 = vmatprep.subr.mxu0 0.0
    %438 = vmatpush1.msra.mxu0 0.0
    %439 = vmatprep.subr.mxu0 0.0
    %440 = vmatpush1.msra.mxu0 0.0
    %441 = vmatprep.subr.mxu0 0.0
    %442 = vmatpush1.msra.mxu0 0.0
    %443 = vmatprep.subr.mxu0 0.0
    %444 = vmatpush1.msra.mxu0 0.0
    %445 = vmatprep.subr.mxu0 0.0
    %446 = vmatpush1.msra.mxu0 0.0
    %447 = vmatprep.subr.mxu0 0.0
    %448 = vmatpush1.msra.mxu0 0.0
    %449 = vmatprep.subr.mxu0 0.0
    %450 = vmatpush1.msra.mxu0 0.0
    %451 = vmatprep.subr.mxu0 0.0
    %452 = vmatpush1.msra.mxu0 0.0
    %453 = vmatprep.subr.mxu0 0.0
    %454 = vmatpush1.msra.mxu0 0.0
    %455 = vmatprep.subr.mxu0 0.0
    %456 = vmatpush1.msra.mxu0 0.0
    %457 = vmatprep.subr.mxu0 0.0
    %458 = vmatpush1.msra.mxu0 0.0
    %459 = vmatprep.subr.mxu0 0.0
    %460 = vmatpush1.msra.mxu0 0.0
    %461 = vmatprep.subr.mxu0 0.0
    %462 = vmatpush1.msra.mxu0 0.0
    %463 = vmatprep.subr.mxu0 0.0
    %464 = vmatpush1.msra.mxu0 0.0
    %465 = vmatprep.subr.mxu0 0.0
    %466 = vmatpush1.msra.mxu0 0.0
    %467 = vmatprep.subr.mxu0 0.0
    %468 = vmatpush1.msra.mxu0 0.0
    %469 = vmatprep.subr.mxu0 0.0
    %470 = vmatpush1.msra.mxu0 0.0
    %471 = vmatprep.subr.mxu0 0.0
    %472 = vmatpush1.msra.mxu0 0.0
    %473 = vmatprep.subr.mxu0 0.0
    %474 = vmatpush1.msra.mxu0 0.0
    %475 = vmatprep.subr.mxu0 0.0
    %476 = vmatpush1.msra.mxu0 0.0
    %477 = vmatprep.mubr.f32.mxu0 0.0
    %478 = vmatmul.mubr.f32.gmra.mrb[0].mxu0 %v411
    %v479 = vpop.f32.mrb[0].mxu0
    %v480 = vadd.f32 0.0, %v479
    %v481 = vpop.f32.mrb[0].mxu0
    %482 = vdwg.mxu0
    %v483 = vrcp.pop %v339
    %v484 = vmul.f32 %v480, %v483
    %485 = vst.msk [vmem:[#allocation2] sm:$0xff] %vm178, %v484
    %v486 = vmax.f32 %v320, %v322
    %487 = vmax.xlane.f32.xlu0 %v486
    %v488 = vpop.xlane.xlu0 %487
    %v489 = vsub.f32 %v320, %v488
    %v490 = vsub.f32 %v322, %v488
    %v491 = vmul.f32 %v489, 1.442695
    %v492 = vpow.pop %v491
    %v493 = vmul.f32 %v490, 1.442695
    %v494 = vpow.pop %v493
    %v495 = vadd.f32 %v492, %v494
    %496 = vadd.xlane.f32.xlu0 %v495
    %v497 = vpop.xlane.xlu0 %496
    %498 = vmatprep.subr.mxu0 %v21
    %499 = vmatpush1.xpose.msra.mxu0 %v20
    %500 = vmatprep.subr.mxu0 %v25
    %501 = vmatpush1.xpose.msra.mxu0 %v24
    %502 = vmatprep.subr.mxu0 %v29
    %503 = vmatpush1.xpose.msra.mxu0 %v28
    %504 = vmatprep.subr.mxu0 %v33
    %505 = vmatpush1.xpose.msra.mxu0 %v32
    %506 = vmatprep.subr.mxu0 0.0
    %507 = vmatpush1.xpose.msra.mxu0 0.0
    %508 = vmatprep.subr.mxu0 0.0
    %509 = vmatpush1.xpose.msra.mxu0 0.0
    %510 = vmatprep.subr.mxu0 0.0
    %511 = vmatpush1.xpose.msra.mxu0 0.0
    %512 = vmatprep.subr.mxu0 0.0
    %513 = vmatpush1.xpose.msra.mxu0 0.0
    %514 = vmatprep.subr.mxu0 0.0
    %515 = vmatpush1.xpose.msra.mxu0 0.0
    %516 = vmatprep.subr.mxu0 0.0
    %517 = vmatpush1.xpose.msra.mxu0 0.0
    %518 = vmatprep.subr.mxu0 0.0
    %519 = vmatpush1.xpose.msra.mxu0 0.0
    %520 = vmatprep.subr.mxu0 0.0
    %521 = vmatpush1.xpose.msra.mxu0 0.0
    %522 = vmatprep.subr.mxu0 0.0
    %523 = vmatpush1.xpose.msra.mxu0 0.0
    %524 = vmatprep.subr.mxu0 0.0
    %525 = vmatpush1.xpose.msra.mxu0 0.0
    %526 = vmatprep.subr.mxu0 0.0
    %527 = vmatpush1.xpose.msra.mxu0 0.0
    %528 = vmatprep.subr.mxu0 0.0
    %529 = vmatpush1.xpose.msra.mxu0 0.0
    %530 = vmatprep.subr.mxu0 0.0
    %531 = vmatpush1.xpose.msra.mxu0 0.0
    %532 = vmatprep.subr.mxu0 0.0
    %533 = vmatpush1.xpose.msra.mxu0 0.0
    %534 = vmatprep.subr.mxu0 0.0
    %535 = vmatpush1.xpose.msra.mxu0 0.0
    %536 = vmatprep.subr.mxu0 0.0
    %537 = vmatpush1.xpose.msra.mxu0 0.0
    %538 = vmatprep.subr.mxu0 0.0
    %539 = vmatpush1.xpose.msra.mxu0 0.0
    %540 = vmatprep.subr.mxu0 0.0
    %541 = vmatpush1.xpose.msra.mxu0 0.0
    %542 = vmatprep.subr.mxu0 0.0
    %543 = vmatpush1.xpose.msra.mxu0 0.0
    %544 = vmatprep.subr.mxu0 0.0
    %545 = vmatpush1.xpose.msra.mxu0 0.0
    %546 = vmatprep.subr.mxu0 0.0
    %547 = vmatpush1.xpose.msra.mxu0 0.0
    %548 = vmatprep.subr.mxu0 0.0
    %549 = vmatpush1.xpose.msra.mxu0 0.0
    %550 = vmatprep.subr.mxu0 0.0
    %551 = vmatpush1.xpose.msra.mxu0 0.0
    %552 = vmatprep.subr.mxu0 0.0
    %553 = vmatpush1.xpose.msra.mxu0 0.0
    %554 = vmatprep.subr.mxu0 0.0
    %555 = vmatpush1.xpose.msra.mxu0 0.0
    %556 = vmatprep.subr.mxu0 0.0
    %557 = vmatpush1.xpose.msra.mxu0 0.0
    %558 = vmatprep.subr.mxu0 0.0
    %559 = vmatpush1.xpose.msra.mxu0 0.0
    %560 = vmatprep.subr.mxu0 0.0
    %561 = vmatpush1.xpose.msra.mxu0 0.0
    %562 = vmatprep.mubr.f32.mxu0 %v494
    %563 = vmatmul.mubr.f32.gmra.mrb[0].mxu0 %v492
    %v564 = vpop.f32.mrb[0].mxu0
    %v565 = vadd.f32 0.0, %v564
    %v566 = vpop.f32.mrb[0].mxu0
    %567 = vdwg.mxu0
    %v569 = vsel %vm178, %v565, 0
    %571 = vmatprep.subr.mxu0 0.0
    %572 = vmatpush1.msra.mxu0 %v324
    %573 = vmatprep.subr.mxu0 0.0
    %574 = vmatpush1.msra.mxu0 %v325
    %575 = vmatprep.subr.mxu0 0.0
    %576 = vmatpush1.msra.mxu0 %v326
    %577 = vmatprep.subr.mxu0 0.0
    %578 = vmatpush1.msra.mxu0 %v327
    %579 = vmatprep.subr.mxu0 0.0
    %580 = vmatpush1.msra.mxu0 0.0
    %581 = vmatprep.subr.mxu0 0.0
    %582 = vmatpush1.msra.mxu0 0.0
    %583 = vmatprep.subr.mxu0 0.0
    %584 = vmatpush1.msra.mxu0 0.0
    %585 = vmatprep.subr.mxu0 0.0
    %586 = vmatpush1.msra.mxu0 0.0
    %587 = vmatprep.subr.mxu0 0.0
    %588 = vmatpush1.msra.mxu0 0.0
    %589 = vmatprep.subr.mxu0 0.0
    %590 = vmatpush1.msra.mxu0 0.0
    %591 = vmatprep.subr.mxu0 0.0
    %592 = vmatpush1.msra.mxu0 0.0
    %593 = vmatprep.subr.mxu0 0.0
    %594 = vmatpush1.msra.mxu0 0.0
    %595 = vmatprep.subr.mxu0 0.0
    %596 = vmatpush1.msra.mxu0 0.0
    %597 = vmatprep.subr.mxu0 0.0
    %598 = vmatpush1.msra.mxu0 0.0
    %599 = vmatprep.subr.mxu0 0.0
    %600 = vmatpush1.msra.mxu0 0.0
    %601 = vmatprep.subr.mxu0 0.0
    %602 = vmatpush1.msra.mxu0 0.0
    %603 = vmatprep.subr.mxu0 0.0
    %604 = vmatpush1.msra.mxu0 0.0
    %605 = vmatprep.subr.mxu0 0.0
    %606 = vmatpush1.msra.mxu0 0.0
    %607 = vmatprep.subr.mxu0 0.0
    %608 = vmatpush1.msra.mxu0 0.0
    %609 = vmatprep.subr.mxu0 0.0
    %610 = vmatpush1.msra.mxu0 0.0
    %611 = vmatprep.subr.mxu0 0.0
    %612 = vmatpush1.msra.mxu0 0.0
    %613 = vmatprep.subr.mxu0 0.0
    %614 = vmatpush1.msra.mxu0 0.0
    %615 = vmatprep.subr.mxu0 0.0
    %616 = vmatpush1.msra.mxu0 0.0
    %617 = vmatprep.subr.mxu0 0.0
    %618 = vmatpush1.msra.mxu0 0.0
    %619 = vmatprep.subr.mxu0 0.0
    %620 = vmatpush1.msra.mxu0 0.0
    %621 = vmatprep.subr.mxu0 0.0
    %622 = vmatpush1.msra.mxu0 0.0
    %623 = vmatprep.subr.mxu0 0.0
    %624 = vmatpush1.msra.mxu0 0.0
    %625 = vmatprep.subr.mxu0 0.0
    %626 = vmatpush1.msra.mxu0 0.0
    %627 = vmatprep.subr.mxu0 0.0
    %628 = vmatpush1.msra.mxu0 0.0
    %629 = vmatprep.subr.mxu0 0.0
    %630 = vmatpush1.msra.mxu0 0.0
    %631 = vmatprep.subr.mxu0 0.0
    %632 = vmatpush1.msra.mxu0 0.0
    %633 = vmatprep.subr.mxu0 0.0
    %634 = vmatpush1.msra.mxu0 0.0
    %635 = vmatprep.mubr.f32.mxu0 0.0
    %636 = vmatmul.mubr.f32.gmra.mrb[0].mxu0 %v569
    %v637 = vpop.f32.mrb[0].mxu0
    %v638 = vadd.f32 0.0, %v637
    %v639 = vpop.f32.mrb[0].mxu0
    %640 = vdwg.mxu0
    %v641 = vrcp.pop %v497
    %v642 = vmul.f32 %v638, %v641
    %s643 = scalar_lea.vmem [#allocation2], 8
    %644 = vst.msk [vmem:[%s643] sm:$0xff] %vm178, %v642
    // Predicated region
    $region18: #{token_learner_v11.1} parent=1 // pred_check
      _
    $region19: #{token_learner_v11.1} parent=1 // pred_check_branch
      %646 = sbr.rel (0) target = $region21
    $region20: #{token_learner_v11.1} parent=1 // pred_region
      %s648 = ssub.s32 256, 256
      %649 = vsyncadd [#allocation3], %s648
      %s650 = sshll.u32 [#allocation2], 4
      %s651 = int_to_ptr.vmem [resolvable:$true] %s650
      %656 = dma.vmem_to_hbm [thread:$0]  %s651, 256, %s4, [#allocation3], 128, 128, 8
    $region21: #{token_learner_v11.1} parent=1 // pred_fallthru
      _
    // Predicated region
    $region22: #{token_learner_v11.1} parent=1 // pred_check
      _
    $region23: #{token_learner_v11.1} parent=1 // pred_check_branch
      %658 = sbr.rel (0) target = $region25
    $region24: #{token_learner_v11.1} parent=1 // pred_region
      %659 = dma.done [#allocation3], 256
    $region25: #{token_learner_v11.1} parent=1 // pred_fallthru
      _
    %660 = vsyncpa [#allocation3], 1

</llo_original>
